<compile_context>
chip_gen: v7x
topology: tpu7x:2x2x1
jax: 0.10.0
libtpu: 0.0.40
codegen_flags: <defaults>
</compile_context>

<pallas_src>
import jax
import jax.numpy as jnp
from jax.experimental import pallas as pl
from jax.experimental.pallas import tpu as pltpu

LANE = 128      # lane width (last dim granularity)
SUBLANE = 8     # f32 sublane granularity (second-to-last dim)


def _round_up(x: int, m: int) -> int:
    return ((x + m - 1) // m) * m


def dqn_kernel(x_ref, w1_ref, b1_ref, w2_ref, b2_ref, out_ref):
    """Fused MLP forward for one batch tile: relu(x @ W1 + b1) @ W2 + b2."""
    x = x_ref[...]
    if x.dtype != jnp.float32:          # matches PyTorch's x.float(); no-op if already f32
        x = x.astype(jnp.float32)
    # Weights/biases arrive as bf16 in HBM/VMEM; compute in f32 on the MXU/VPU.
    w1 = w1_ref[...].astype(jnp.float32)
    b1 = b1_ref[...].astype(jnp.float32)
    w2 = w2_ref[...].astype(jnp.float32)
    b2 = b2_ref[...].astype(jnp.float32)

    h = jnp.dot(x, w1, preferred_element_type=jnp.float32) + b1
    h = jnp.maximum(h, 0.0)             # ReLU on the VPU (f32)
    q = jnp.dot(h, w2, preferred_element_type=jnp.float32) + b2
    out_ref[...] = q.astype(out_ref.dtype)


def dqn_forward(x, w1, b1, w2, b2, *, block_batch: int = 512,
                vmem_limit_bytes: int = 32 * 1024 * 1024):
    """x: [B, obs_size] -> q-values [B, n_actions].

    Weights are stored as [in_features, out_features] (transposed vs. PyTorch)
    so the kernel computes x @ W + b directly.
    """
    batch, obs_size = x.shape
    obs_in, hidden = w1.shape
    hidden2, n_actions = w2.shape
    assert obs_in == obs_size and hidden2 == hidden

    b1 = b1.reshape(1, hidden)
    b2 = b2.reshape(1, n_actions)

    # Padded sizes: K to >=8 sublanes, output lanes to a multiple of 128,
    # batch to a multiple of the (sublane-aligned) batch tile.
    k_pad = max(_round_up(obs_size, SUBLANE), SUBLANE)
    n_pad = max(_round_up(n_actions, LANE), LANE)
    tb = min(_round_up(block_batch, SUBLANE), _round_up(batch, SUBLANE))
    b_pad = _round_up(batch, tb)

    xp = jnp.pad(x, ((0, b_pad - batch), (0, k_pad - obs_size)))
    w1p = jnp.pad(w1, ((0, k_pad - obs_size), (0, 0)))
    w2p = jnp.pad(w2, ((0, 0), (0, n_pad - n_actions)))
    b2p = jnp.pad(b2, ((0, 0), (0, n_pad - n_actions)))

    grid = (pl.cdiv(b_pad, tb),)
    q_pad = pl.pallas_call(
        dqn_kernel,
        out_shape=jax.ShapeDtypeStruct((b_pad, n_pad), jnp.float32),
        grid=grid,
        in_specs=[
            # x streams per batch tile (double-buffered by the pipeline).
            pl.BlockSpec((tb, k_pad), lambda i: (i, 0)),
            # Weights/biases: constant block index -> VMEM-resident across the grid.
            pl.BlockSpec((k_pad, hidden), lambda i: (0, 0)),
            pl.BlockSpec((1, hidden), lambda i: (0, 0)),
            pl.BlockSpec((hidden, n_pad), lambda i: (0, 0)),
            pl.BlockSpec((1, n_pad), lambda i: (0, 0)),
        ],
        out_specs=pl.BlockSpec((tb, n_pad), lambda i: (i, 0)),
        compiler_params=pltpu.CompilerParams(
            dimension_semantics=("parallel",),   # megacore split on v7x
            vmem_limit_bytes=vmem_limit_bytes,
        ),
    )(xp, w1p, b1, w2p, b2p)

    # Strip batch padding and the lane padding of the output columns.
    return q_pad[:batch, :n_actions]


def init_dqn_params(key, obs_size, n_actions, hidden_size=128, dtype=jnp.bfloat16):
    """Deterministic synthetic init (mimics PyTorch Linear's uniform fan-in init).

    Parameters are stored in bf16 (HBM-traffic optimization); the kernel casts
    to f32 and accumulates in f32.
    """
    k1, k2, k3, k4 = jax.random.split(key, 4)
    bound1 = 1.0 / jnp.sqrt(jnp.float32(obs_size))
    bound2 = 1.0 / jnp.sqrt(jnp.float32(hidden_size))
    # Stored as [in, out] so the kernel does x @ W.
    w1 = jax.random.uniform(k1, (obs_size, hidden_size), jnp.float32, -bound1, bound1)
    b1 = jax.random.uniform(k2, (1, hidden_size), jnp.float32, -bound1, bound1)
    w2 = jax.random.uniform(k3, (hidden_size, n_actions), jnp.float32, -bound2, bound2)
    b2 = jax.random.uniform(k4, (1, n_actions), jnp.float32, -bound2, bound2)
    return (w1.astype(dtype), b1.astype(dtype), w2.astype(dtype), b2.astype(dtype))


def _reference(x, w1, b1, w2, b2):
    """Pure-JAX reference with identical semantics (bf16 params dequantized to f32)."""
    xf = x.astype(jnp.float32)
    h = jnp.maximum(xf @ w1.astype(jnp.float32) + b1.astype(jnp.float32), 0.0)
    return h @ w2.astype(jnp.float32) + b2.astype(jnp.float32)


if __name__ == "__main__":
    obs_size, n_actions, hidden_size = 4, 2, 128

    key = jax.random.PRNGKey(0)
    k_x, k_x2, k_p = jax.random.split(key, 3)
    w1, b1, w2, b2 = init_dqn_params(k_p, obs_size, n_actions, hidden_size)

    # Toy single-tile case (B=2 -> padded to one 8-row tile, grid=(1,)).
    x_small = jax.random.normal(k_x, (2, obs_size), jnp.float32)
    q_small = dqn_forward(x_small, w1, b1, w2, b2)
    jax.block_until_ready(q_small)
    assert q_small.shape == (2, n_actions)
    assert jnp.allclose(q_small, _reference(x_small, w1, b1, w2, b2),
                        atol=1e-4, rtol=1e-4)

    # Batched (replay-buffer style) case exercising the multi-tile grid path
    # (B=1024 -> TB=512, grid=(2,)).
    x_big = jax.random.normal(k_x2, (1024, obs_size), jnp.float32)
    q_big = dqn_forward(x_big, w1, b1, w2, b2)
    jax.block_until_ready(q_big)
    assert q_big.shape == (1024, n_actions)
    assert jnp.allclose(q_big, _reference(x_big, w1, b1, w2, b2),
                        atol=1e-4, rtol=1e-4)

    print("KERNEL_OK")
</pallas_src>

<mosaic_0001>
module attributes {stable_mosaic.version = 11 : i64} {
  func.func @dqn_kernel(%arg0: i32, %arg1: memref<8x8xf32, #tpu.memory_space<vmem>>, %arg2: memref<8x128xbf16, #tpu.memory_space<vmem>>, %arg3: memref<1x128xbf16, #tpu.memory_space<vmem>>, %arg4: memref<128x128xbf16, #tpu.memory_space<vmem>>, %arg5: memref<1x128xbf16, #tpu.memory_space<vmem>>, %arg6: memref<8x128xf32, #tpu.memory_space<vmem>>) attributes {dimension_semantics = [#tpu.dimension_semantics<parallel>], iteration_bounds = array<i64: 1>, scalar_prefetch = 0 : i64, scratch_operands = 0 : i64, tpu.core_type = #tpu.core_type<tc>, window_params = [{transform_indices = @transform_0, window_bounds = array<i64: 8, 8>}, {pipeline_mode = #tpu.pipeline_mode<synchronous>, transform_indices = @transform_1, window_bounds = array<i64: 8, 128>}, {pipeline_mode = #tpu.pipeline_mode<synchronous>, transform_indices = @transform_2, window_bounds = array<i64: 1, 128>}, {pipeline_mode = #tpu.pipeline_mode<synchronous>, transform_indices = @transform_3, window_bounds = array<i64: 128, 128>}, {pipeline_mode = #tpu.pipeline_mode<synchronous>, transform_indices = @transform_4, window_bounds = array<i64: 1, 128>}, {transform_indices = @transform_5, window_bounds = array<i64: 8, 128>}]} {
    %c0 = arith.constant 0 : index
    %c0_0 = arith.constant 0 : index
    %0 = vector.load %arg1[%c0, %c0_0] : memref<8x8xf32, #tpu.memory_space<vmem>>, vector<8x8xf32>
    %c0_1 = arith.constant 0 : index
    %c0_2 = arith.constant 0 : index
    %1 = vector.load %arg2[%c0_1, %c0_2] : memref<8x128xbf16, #tpu.memory_space<vmem>>, vector<8x128xbf16>
    %2 = arith.extf %1 : vector<8x128xbf16> to vector<8x128xf32>
    %c0_3 = arith.constant 0 : index
    %c0_4 = arith.constant 0 : index
    %3 = vector.load %arg3[%c0_3, %c0_4] : memref<1x128xbf16, #tpu.memory_space<vmem>>, vector<1x128xbf16>
    %4 = arith.extf %3 : vector<1x128xbf16> to vector<1x128xf32>
    %c0_5 = arith.constant 0 : index
    %c0_6 = arith.constant 0 : index
    %5 = vector.load %arg4[%c0_5, %c0_6] : memref<128x128xbf16, #tpu.memory_space<vmem>>, vector<128x128xbf16>
    %6 = arith.extf %5 : vector<128x128xbf16> to vector<128x128xf32>
    %c0_7 = arith.constant 0 : index
    %c0_8 = arith.constant 0 : index
    %7 = vector.load %arg5[%c0_7, %c0_8] : memref<1x128xbf16, #tpu.memory_space<vmem>>, vector<1x128xbf16>
    %8 = arith.extf %7 : vector<1x128xbf16> to vector<1x128xf32>
    %cst = arith.constant dense<0.000000e+00> : vector<8x128xf32>
    %9 = tpu.matmul %0, %2, %cst {dimension_numbers = #tpu.dot_dimension_numbers<[1], [0], [0], [1], [0, 0, 1, 1], [], []>} : vector<8x8xf32>, vector<8x128xf32>, vector<8x128xf32> -> vector<8x128xf32>
    %10 = vector.broadcast %4 : vector<1x128xf32> to vector<8x128xf32>
    %11 = arith.addf %9, %10 : vector<8x128xf32>
    %cst_9 = arith.constant 0.000000e+00 : f32
    %12 = vector.broadcast %cst_9 : f32 to vector<8x128xf32>
    %13 = arith.maximumf %11, %12 : vector<8x128xf32>
    %cst_10 = arith.constant dense<0.000000e+00> : vector<8x128xf32>
    %14 = tpu.matmul %13, %6, %cst_10 {dimension_numbers = #tpu.dot_dimension_numbers<[1], [0], [0], [1], [0, 0, 1, 1], [], []>} : vector<8x128xf32>, vector<128x128xf32>, vector<8x128xf32> -> vector<8x128xf32>
    %15 = vector.broadcast %8 : vector<1x128xf32> to vector<8x128xf32>
    %16 = arith.addf %14, %15 : vector<8x128xf32>
    %c0_11 = arith.constant 0 : index
    %c0_12 = arith.constant 0 : index
    %17 = vector.load %arg6[%c0_11, %c0_12] : memref<8x128xf32, #tpu.memory_space<vmem>>, vector<8x128xf32>
    tpu.vector_store %arg6[%c0_11, %c0_12], %16 {strides = array<i32>} : memref<8x128xf32, #tpu.memory_space<vmem>>, vector<8x128xf32>,
    return
  }
  func.func @transform_0(%arg0: i32) -> (i32, i32) {
    %c0_i32 = arith.constant 0 : i32
    %c0_i32_0 = arith.constant 0 : i32
    return %arg0, %c0_i32 : i32, i32
  }
  func.func @transform_1(%arg0: i32) -> (i32, i32) {
    %c0_i32 = arith.constant 0 : i32
    %c0_i32_0 = arith.constant 0 : i32
    %c0_i32_1 = arith.constant 0 : i32
    return %c0_i32, %c0_i32_0 : i32, i32
  }
  func.func @transform_2(%arg0: i32) -> (i32, i32) {
    %c0_i32 = arith.constant 0 : i32
    %c0_i32_0 = arith.constant 0 : i32
    %c0_i32_1 = arith.constant 0 : i32
    return %c0_i32, %c0_i32_0 : i32, i32
  }
  func.func @transform_3(%arg0: i32) -> (i32, i32) {
    %c0_i32 = arith.constant 0 : i32
    %c0_i32_0 = arith.constant 0 : i32
    %c0_i32_1 = arith.constant 0 : i32
    return %c0_i32, %c0_i32_0 : i32, i32
  }
  func.func @transform_4(%arg0: i32) -> (i32, i32) {
    %c0_i32 = arith.constant 0 : i32
    %c0_i32_0 = arith.constant 0 : i32
    %c0_i32_1 = arith.constant 0 : i32
    return %c0_i32, %c0_i32_0 : i32, i32
  }
  func.func @transform_5(%arg0: i32) -> (i32, i32) {
    %c0_i32 = arith.constant 0 : i32
    %c0_i32_0 = arith.constant 0 : i32
    return %arg0, %c0_i32 : i32, i32
  }
}

</mosaic_0001>

<llo_original>
// kernel: tpu_custom_call.1
$region0: #{tpu_custom_call.1}
  #allocation0 [shape = 'u32[]', space=smem, size = 0x4, offset = 0x4, fixed_abs, tag = 'smem constant byte address 0x4 - core index']
  #allocation1 [shape = 'u32[144,128]{1,0:T(1,128)}', space=vmem, size = 0x12000, scoped, tag = 'internal scratch']
  %s0 = inlined_call_operand.hbm [shape: f32[8,8], index: 0, kind: input, shape index: {}]
  %s1 = inlined_call_operand.hbm [shape: bf16[8,128], index: 1, kind: input, shape index: {}]
  %s2 = inlined_call_operand.vmem [shape: bf16[1,128], index: 2, kind: input, shape index: {}]
  %s3 = inlined_call_operand.hbm [shape: bf16[128,128], index: 3, kind: input, shape index: {}]
  %s4 = inlined_call_operand.vmem [shape: bf16[1,128], index: 4, kind: input, shape index: {}]
  %s5 = inlined_call_operand.hbm [shape: f32[8,128], index: 5, kind: output, shape index: {}]
  %s6 = sld [smem:[#allocation0]]
  $region42: #{tpu_custom_call.1} parent=0
    _
  %s8 = ssub.s32 1, %s6
  %s9 = scalar_select 0, %s8, %s6
  $region1: #{tpu_custom_call.1} parent=0
    #allocation2 [shape = 'u8[4096]{0}', space=vmem, size = 0x1000, scoped, tag = 'input window, operand 0, single buffered']
    #allocation3 [shape = 's32[1]{0}', space=sflag, size = 0x4, scoped, tag = 'scoped memory for tpu_custom_call.1']
    #allocation4 [shape = 's32[1]{0}', space=sflag, size = 0x4, scoped, tag = 'scoped memory for tpu_custom_call.1']
    #allocation5 [shape = 'u8[2048]{0}', space=vmem, size = 0x800, scoped, tag = 'input window, operand 1, single buffered']
    #allocation6 [shape = 's32[1]{0}', space=sflag, size = 0x4, scoped, tag = 'scoped memory for tpu_custom_call.1']
    #allocation7 [shape = 'u8[32768]{0}', space=vmem, size = 0x8000, scoped, tag = 'input window, operand 3, single buffered']
    #allocation8 [shape = 'u8[4096]{0}', space=vmem, size = 0x1000, scoped, tag = 'output window, operand 0, single buffered']
    %10 = vsyncpa [#allocation3], 0
    %11 = vsyncpa [#allocation6], 0
    %12 = vsyncpa [#allocation4], 0
    // Predicated region
    $region2: #{tpu_custom_call.1} parent=1 // pred_check
      _
    $region3: #{tpu_custom_call.1} parent=1 // pred_check_branch
      %14 = sbr.rel (0) target = $region5
    $region4: #{tpu_custom_call.1} parent=1 // pred_region
      %s16 = ssub.s32 128, 128
      %17 = vsyncadd [#allocation3], %s16
      %s19 = sshll.u32 [#allocation2], 4
      %s20 = int_to_ptr.vmem [resolvable:$true] %s19
      %22 = dma.hbm_to_vmem [thread:$0]  %s0, 128, %s20, [#allocation3]
    $region5: #{tpu_custom_call.1} parent=1 // pred_fallthru
      _
    // Predicated region
    $region6: #{tpu_custom_call.1} parent=1 // pred_check
      _
    $region7: #{tpu_custom_call.1} parent=1 // pred_check_branch
      %24 = sbr.rel (0) target = $region9
    $region8: #{tpu_custom_call.1} parent=1 // pred_region
      %s26 = ssub.s32 64, 64
      %27 = vsyncadd [#allocation6], %s26
      %s29 = sshll.u32 [#allocation5], 4
      %s30 = int_to_ptr.vmem [resolvable:$true] %s29
      %32 = dma.hbm_to_vmem [thread:$0]  %s1, 64, %s30, [#allocation6]
    $region9: #{tpu_custom_call.1} parent=1 // pred_fallthru
      _
    // Predicated region
    $region10: #{tpu_custom_call.1} parent=1 // pred_check
      _
    $region11: #{tpu_custom_call.1} parent=1 // pred_check_branch
      %34 = sbr.rel (0) target = $region13
    $region12: #{tpu_custom_call.1} parent=1 // pred_region
      _
    $region13: #{tpu_custom_call.1} parent=1 // pred_fallthru
      _
    // Predicated region
    $region14: #{tpu_custom_call.1} parent=1 // pred_check
      _
    $region15: #{tpu_custom_call.1} parent=1 // pred_check_branch
      %36 = sbr.rel (0) target = $region17
    $region16: #{tpu_custom_call.1} parent=1 // pred_region
      %s38 = ssub.s32 1024, 1024
      %39 = vsyncadd [#allocation6], %s38
      %s40 = sshll.u32 [#allocation7], 4
      %s41 = int_to_ptr.vmem [resolvable:$true] %s40
      %46 = dma.hbm_to_vmem [thread:$0]  %s3, 1024, %s41, [#allocation6], 64, 64, 4
    $region17: #{tpu_custom_call.1} parent=1 // pred_fallthru
      _
    // Predicated region
    $region18: #{tpu_custom_call.1} parent=1 // pred_check
      _
    $region19: #{tpu_custom_call.1} parent=1 // pred_check_branch
      %48 = sbr.rel (0) target = $region21
    $region20: #{tpu_custom_call.1} parent=1 // pred_region
      _
    $region21: #{tpu_custom_call.1} parent=1 // pred_fallthru
      _
    // Predicated region
    $region22: #{tpu_custom_call.1} parent=1 // pred_check
      _
    $region23: #{tpu_custom_call.1} parent=1 // pred_check_branch
      %50 = sbr.rel (0) target = $region25
    $region24: #{tpu_custom_call.1} parent=1 // pred_region
      %51 = dma.done [#allocation3], 128
    $region25: #{tpu_custom_call.1} parent=1 // pred_fallthru
      _
    // Predicated region
    $region26: #{tpu_custom_call.1} parent=1 // pred_check
      _
    $region27: #{tpu_custom_call.1} parent=1 // pred_check_branch
      %53 = sbr.rel (0) target = $region29
    $region28: #{tpu_custom_call.1} parent=1 // pred_region
      %54 = dma.done [#allocation6], 64
    $region29: #{tpu_custom_call.1} parent=1 // pred_fallthru
      _
    // Predicated region
    $region30: #{tpu_custom_call.1} parent=1 // pred_check
      _
    $region31: #{tpu_custom_call.1} parent=1 // pred_check_branch
      %56 = sbr.rel (0) target = $region33
    $region32: #{tpu_custom_call.1} parent=1 // pred_region
      %57 = dma.done [#allocation6], 1024
    $region33: #{tpu_custom_call.1} parent=1 // pred_fallthru
      _
    %v58 = vld [vmem:[#allocation2] sm:$0xff]
    %v59 = vld [vmem:[#allocation5] sm:$0xf]
    %v60 = vunpack.c.l.bf16 %v59
    %v61 = vld [vmem:[%s2] sm:$0x1]
    %v62 = vunpack.c.l.bf16 %v61
    %v63 = vld [vmem:[#allocation7] sm:$0xf]
    %v64 = vld [vmem:[#allocation7 + $0x4] sm:$0xf]
    %v65 = vld [vmem:[#allocation7 + $0x8] sm:$0xf]
    %v66 = vld [vmem:[#allocation7 + $0xc] sm:$0xf]
    %v67 = vld [vmem:[#allocation7 + $0x10] sm:$0xf]
    %v68 = vld [vmem:[#allocation7 + $0x14] sm:$0xf]
    %v69 = vld [vmem:[#allocation7 + $0x18] sm:$0xf]
    %v70 = vld [vmem:[#allocation7 + $0x1c] sm:$0xf]
    %v71 = vld [vmem:[#allocation7 + $0x20] sm:$0xf]
    %v72 = vld [vmem:[#allocation7 + $0x24] sm:$0xf]
    %v73 = vld [vmem:[#allocation7 + $0x28] sm:$0xf]
    %v74 = vld [vmem:[#allocation7 + $0x2c] sm:$0xf]
    %v75 = vld [vmem:[#allocation7 + $0x30] sm:$0xf]
    %v76 = vld [vmem:[#allocation7 + $0x34] sm:$0xf]
    %v77 = vld [vmem:[#allocation7 + $0x38] sm:$0xf]
    %v78 = vld [vmem:[#allocation7 + $0x3c] sm:$0xf]
    %v79 = vunpack.c.l.bf16 %v63
    %v80 = vunpack.c.l.bf16 %v64
    %v81 = vunpack.c.l.bf16 %v65
    %v82 = vunpack.c.l.bf16 %v66
    %v83 = vunpack.c.l.bf16 %v67
    %v84 = vunpack.c.l.bf16 %v68
    %v85 = vunpack.c.l.bf16 %v69
    %v86 = vunpack.c.l.bf16 %v70
    %v87 = vunpack.c.l.bf16 %v71
    %v88 = vunpack.c.l.bf16 %v72
    %v89 = vunpack.c.l.bf16 %v73
    %v90 = vunpack.c.l.bf16 %v74
    %v91 = vunpack.c.l.bf16 %v75
    %v92 = vunpack.c.l.bf16 %v76
    %v93 = vunpack.c.l.bf16 %v77
    %v94 = vunpack.c.l.bf16 %v78
    %v95 = vld [vmem:[%s4] sm:$0x1]
    %v96 = vunpack.c.l.bf16 %v95
    %v97 = vlaneseq
    %v98 = vshrl.u32 %v97, 7
    %v99 = vsub.s32 0, %v98
    %v100 = vrot.slane %v62, %v99
    %vm101 = vcmask 64512
    %v103 = vsel %vm101, %v58, 0
    %105 = vmatprep.subr.mxu0 0.0
    %106 = vmatpush1.msra.mxu0 %v60
    %107 = vmatprep.subr.mxu0 0.0
    %108 = vmatpush1.msra.mxu0 0.0
    %109 = vmatprep.subr.mxu0 0.0
    %110 = vmatpush1.msra.mxu0 0.0
    %111 = vmatprep.subr.mxu0 0.0
    %112 = vmatpush1.msra.mxu0 0.0
    %113 = vmatprep.subr.mxu0 0.0
    %114 = vmatpush1.msra.mxu0 0.0
    %115 = vmatprep.subr.mxu0 0.0
    %116 = vmatpush1.msra.mxu0 0.0
    %117 = vmatprep.subr.mxu0 0.0
    %118 = vmatpush1.msra.mxu0 0.0
    %119 = vmatprep.subr.mxu0 0.0
    %120 = vmatpush1.msra.mxu0 0.0
    %121 = vmatprep.subr.mxu0 0.0
    %122 = vmatpush1.msra.mxu0 0.0
    %123 = vmatprep.subr.mxu0 0.0
    %124 = vmatpush1.msra.mxu0 0.0
    %125 = vmatprep.subr.mxu0 0.0
    %126 = vmatpush1.msra.mxu0 0.0
    %127 = vmatprep.subr.mxu0 0.0
    %128 = vmatpush1.msra.mxu0 0.0
    %129 = vmatprep.subr.mxu0 0.0
    %130 = vmatpush1.msra.mxu0 0.0
    %131 = vmatprep.subr.mxu0 0.0
    %132 = vmatpush1.msra.mxu0 0.0
    %133 = vmatprep.subr.mxu0 0.0
    %134 = vmatpush1.msra.mxu0 0.0
    %135 = vmatprep.subr.mxu0 0.0
    %136 = vmatpush1.msra.mxu0 0.0
    %137 = vmatprep.subr.mxu0 0.0
    %138 = vmatpush1.msra.mxu0 0.0
    %139 = vmatprep.subr.mxu0 0.0
    %140 = vmatpush1.msra.mxu0 0.0
    %141 = vmatprep.subr.mxu0 0.0
    %142 = vmatpush1.msra.mxu0 0.0
    %143 = vmatprep.subr.mxu0 0.0
    %144 = vmatpush1.msra.mxu0 0.0
    %145 = vmatprep.subr.mxu0 0.0
    %146 = vmatpush1.msra.mxu0 0.0
    %147 = vmatprep.subr.mxu0 0.0
    %148 = vmatpush1.msra.mxu0 0.0
    %149 = vmatprep.subr.mxu0 0.0
    %150 = vmatpush1.msra.mxu0 0.0
    %151 = vmatprep.subr.mxu0 0.0
    %152 = vmatpush1.msra.mxu0 0.0
    %153 = vmatprep.subr.mxu0 0.0
    %154 = vmatpush1.msra.mxu0 0.0
    %155 = vmatprep.subr.mxu0 0.0
    %156 = vmatpush1.msra.mxu0 0.0
    %157 = vmatprep.subr.mxu0 0.0
    %158 = vmatpush1.msra.mxu0 0.0
    %159 = vmatprep.subr.mxu0 0.0
    %160 = vmatpush1.msra.mxu0 0.0
    %161 = vmatprep.subr.mxu0 0.0
    %162 = vmatpush1.msra.mxu0 0.0
    %163 = vmatprep.subr.mxu0 0.0
    %164 = vmatpush1.msra.mxu0 0.0
    %165 = vmatprep.subr.mxu0 0.0
    %166 = vmatpush1.msra.mxu0 0.0
    %167 = vmatprep.subr.mxu0 0.0
    %168 = vmatpush1.msra.mxu0 0.0
    %169 = vmatprep.mubr.f32.mxu0 0.0
    %170 = vmatmul.mubr.f32.gmra.mrb[0].mxu0 %v103
    %v171 = vpop.f32.mrb[0].mxu0
    %v172 = vadd.f32 %v100, %v171
    %v173 = vpop.f32.mrb[0].mxu0
    %174 = vdwg.mxu0
    %v175 = vmax.f32 %v172, 0.0
    %v176 = vlaneseq
    %v177 = vshrl.u32 %v176, 7
    %v178 = vsub.s32 0, %v177
    %v179 = vrot.slane %v96, %v178
    %180 = vmatprep.subr.mxu0 0.0
    %181 = vmatpush1.msra.mxu0 %v79
    %182 = vmatprep.subr.mxu0 0.0
    %183 = vmatpush1.msra.mxu0 %v80
    %184 = vmatprep.subr.mxu0 0.0
    %185 = vmatpush1.msra.mxu0 %v81
    %186 = vmatprep.subr.mxu0 0.0
    %187 = vmatpush1.msra.mxu0 %v82
    %188 = vmatprep.subr.mxu0 0.0
    %189 = vmatpush1.msra.mxu0 %v83
    %190 = vmatprep.subr.mxu0 0.0
    %191 = vmatpush1.msra.mxu0 %v84
    %192 = vmatprep.subr.mxu0 0.0
    %193 = vmatpush1.msra.mxu0 %v85
    %194 = vmatprep.subr.mxu0 0.0
    %195 = vmatpush1.msra.mxu0 %v86
    %196 = vmatprep.subr.mxu0 0.0
    %197 = vmatpush1.msra.mxu0 %v87
    %198 = vmatprep.subr.mxu0 0.0
    %199 = vmatpush1.msra.mxu0 %v88
    %200 = vmatprep.subr.mxu0 0.0
    %201 = vmatpush1.msra.mxu0 %v89
    %202 = vmatprep.subr.mxu0 0.0
    %203 = vmatpush1.msra.mxu0 %v90
    %204 = vmatprep.subr.mxu0 0.0
    %205 = vmatpush1.msra.mxu0 %v91
    %206 = vmatprep.subr.mxu0 0.0
    %207 = vmatpush1.msra.mxu0 %v92
    %208 = vmatprep.subr.mxu0 0.0
    %209 = vmatpush1.msra.mxu0 %v93
    %210 = vmatprep.subr.mxu0 0.0
    %211 = vmatpush1.msra.mxu0 %v94
    %212 = vmatprep.subr.mxu0 0.0
    %213 = vmatpush1.msra.mxu0 0.0
    %214 = vmatprep.subr.mxu0 0.0
    %215 = vmatpush1.msra.mxu0 0.0
    %216 = vmatprep.subr.mxu0 0.0
    %217 = vmatpush1.msra.mxu0 0.0
    %218 = vmatprep.subr.mxu0 0.0
    %219 = vmatpush1.msra.mxu0 0.0
    %220 = vmatprep.subr.mxu0 0.0
    %221 = vmatpush1.msra.mxu0 0.0
    %222 = vmatprep.subr.mxu0 0.0
    %223 = vmatpush1.msra.mxu0 0.0
    %224 = vmatprep.subr.mxu0 0.0
    %225 = vmatpush1.msra.mxu0 0.0
    %226 = vmatprep.subr.mxu0 0.0
    %227 = vmatpush1.msra.mxu0 0.0
    %228 = vmatprep.subr.mxu0 0.0
    %229 = vmatpush1.msra.mxu0 0.0
    %230 = vmatprep.subr.mxu0 0.0
    %231 = vmatpush1.msra.mxu0 0.0
    %232 = vmatprep.subr.mxu0 0.0
    %233 = vmatpush1.msra.mxu0 0.0
    %234 = vmatprep.subr.mxu0 0.0
    %235 = vmatpush1.msra.mxu0 0.0
    %236 = vmatprep.subr.mxu0 0.0
    %237 = vmatpush1.msra.mxu0 0.0
    %238 = vmatprep.subr.mxu0 0.0
    %239 = vmatpush1.msra.mxu0 0.0
    %240 = vmatprep.subr.mxu0 0.0
    %241 = vmatpush1.msra.mxu0 0.0
    %242 = vmatprep.subr.mxu0 0.0
    %243 = vmatpush1.msra.mxu0 0.0
    %244 = vmatprep.mubr.f32.mxu0 0.0
    %245 = vmatmul.mubr.f32.gmra.mrb[0].mxu0 %v175
    %v246 = vpop.f32.mrb[0].mxu0
    %v247 = vadd.f32 %v179, %v246
    %v248 = vpop.f32.mrb[0].mxu0
    %249 = vdwg.mxu0
    %250 = vst [vmem:[#allocation8] sm:$0xff] %v247
    // Predicated region
    $region34: #{tpu_custom_call.1} parent=1 // pred_check
      _
    $region35: #{tpu_custom_call.1} parent=1 // pred_check_branch
      %252 = sbr.rel (0) target = $region37
    $region36: #{tpu_custom_call.1} parent=1 // pred_region
      %s254 = ssub.s32 128, 128
      %255 = vsyncadd [#allocation4], %s254
      %s257 = sshll.u32 [#allocation8], 4
      %s258 = int_to_ptr.vmem [resolvable:$true] %s257
      %260 = dma.vmem_to_hbm [thread:$0]  %s258, 128, %s5, [#allocation4]
    $region37: #{tpu_custom_call.1} parent=1 // pred_fallthru
      _
    // Predicated region
    $region38: #{tpu_custom_call.1} parent=1 // pred_check
      _
    $region39: #{tpu_custom_call.1} parent=1 // pred_check_branch
      %262 = sbr.rel (0) target = $region41
    $region40: #{tpu_custom_call.1} parent=1 // pred_region
      %263 = dma.done [#allocation4], 128
    $region41: #{tpu_custom_call.1} parent=1 // pred_fallthru
      _
    %264 = vsyncpa [#allocation3], 1
    %265 = vsyncpa [#allocation6], 1
    %266 = vsyncpa [#allocation4], 1

</llo_original>
